<compile_context>
chip_gen: v7x
topology: tpu7x:2x2x1
jax: 0.10.0
libtpu: 0.0.40
codegen_flags: <defaults>
</compile_context>

<pallas_src>
import jax
import jax.numpy as jnp
from jax.experimental import pallas as pl
from jax.experimental.pallas import tpu as pltpu


def bilinear_decoder_kernel(uT_ref, iT_ref, wall_ref, qwpb_ref, qw_ref, qb_ref, o_ref):
    # uT_ref   : (D, TE)    user features of edge sources, edges on lanes
    # iT_ref   : (D, TE)    item features of edge destinations, edges on lanes
    # wall_ref : (S*D, D)   stacked P_s weights (torch (out,in) layout); row s*D+d = P_w[s, d, :]
    # qwpb_ref : (C, D)     Q_W @ P_b   (folded bias contribution)
    # qw_ref   : (C, S)     Q weight
    # qb_ref   : (C, 1)     Q bias
    # o_ref    : (C, TE)    logits, edges on lanes (lane-dense store)
    D = uT_ref.shape[0]
    S = qw_ref.shape[1]

    uT = uT_ref[...]                          # native dtype, MXU operand
    iT = iT_ref[...]
    iTf = iT.astype(jnp.float32)              # f32 for elementwise / reduce

    # One fused MXU matmul for all bases: (S*D, D) @ (D, TE) -> (S*D, TE), f32 accum.
    tT = jnp.dot(wall_ref[...], uT, preferred_element_type=jnp.float32)

    # Bias (+ Q_b) contribution, folded into one small matmul: (C, D) @ (D, TE).
    logits = jnp.dot(qwpb_ref[...], iT, preferred_element_type=jnp.float32)
    logits = logits + qb_ref[...].astype(jnp.float32)        # (C,1) broadcast

    qw = qw_ref[...].astype(jnp.float32)                     # (C, S), tiny
    for s in range(S):                                       # static unroll, S is small
        # per-edge dot over the feature axis: sublane reduce -> (1, TE)
        score_s = jnp.sum(tT[s * D:(s + 1) * D, :] * iTf, axis=0, keepdims=True)
        # mix into the lane-dense (C, TE) accumulator: tiny VPU FMA
        logits = logits + qw[:, s:s + 1] * score_s

    o_ref[...] = logits.astype(o_ref.dtype)


def _round_down(x, m):
    return (x // m) * m


def _round_up(x, m):
    return -(-x // m) * m


def bilinear_decoder(src, dst, ufeats, ifeats, P_w, P_b, Q_w=None, Q_b=None,
                     *, tile_e=2048, compute_dtype=None):
    """P_w: (S, D, D) torch layout (out,in) per basis; P_b: (S, D);
    Q_w: (C, S) torch layout or None (Identity); Q_b: (C,) or None.
    Returns logits of shape (E, C)."""
    E = int(src.shape[0])
    D = int(ufeats.shape[1])
    S = int(P_w.shape[0])
    out_dtype = ufeats.dtype
    dtype = out_dtype if compute_dtype is None else compute_dtype

    if Q_w is None:                               # to_Q_r = nn.Identity branch
        Q_w = jnp.eye(S, dtype=P_w.dtype)
        Q_b = jnp.zeros((S,), dtype=P_w.dtype)
    C = int(Q_w.shape[0])

    # --- wrapper glue: gather edge endpoints, already in edges-on-lanes layout.
    # TODO(synk): move this gather in-kernel (scalar-prefetched indices + DMA).
    u_eT = jnp.take(ufeats.T, src, axis=1).astype(dtype)      # (D, E)
    i_eT = jnp.take(ifeats.T, dst, axis=1).astype(dtype)      # (D, E)

    # Weight prep: stacked P weights, folded bias, Q weight/bias.
    w_all = P_w.reshape(S * D, D).astype(dtype)                                   # (S*D, D)
    qwpb = jnp.dot(Q_w.astype(jnp.float32), P_b.astype(jnp.float32)).astype(dtype)  # (C, D)
    qw = Q_w.astype(dtype)                                                         # (C, S)
    qb = Q_b.reshape(C, 1).astype(jnp.float32)                                     # (C, 1)

    # --- tile_e sized from a VMEM budget (fits v7x's 32 MiB scoped default too) ---
    itemsize = jnp.dtype(dtype).itemsize
    out_itemsize = jnp.dtype(out_dtype).itemsize
    d_pad = _round_up(D, 8)
    c_pad = _round_up(C, 8)
    weight_bytes = (w_all.size + qwpb.size + qw.size) * itemsize + qb.size * 4
    col_bytes = (4 * d_pad * itemsize            # u & i tiles, double-buffered
                 + 2 * c_pad * out_itemsize      # output tile, double-buffered
                 + 4 * (S * d_pad + 2 * c_pad))  # f32 in-kernel intermediates
    budget = (28 << 20) - 2 * weight_bytes
    tile_cap = max(128, _round_down(max(budget // col_bytes, 128), 128))

    if E <= 128:
        tile = E                                  # block == full edge extent
    else:
        req = max(128, _round_down(int(tile_e), 128))
        tile = min(req, tile_cap, max(128, _round_down(E, 128)))
    n_blocks = pl.cdiv(E, tile)

    def _const_index(*_):
        return (0, 0)

    def _call(single_buffer_weights):
        if single_buffer_weights:
            def wspec(shape):
                return pl.BlockSpec(shape, _const_index, pipeline_mode=pl.Buffered(1))
        else:
            def wspec(shape):
                return pl.BlockSpec(shape, _const_index)

        return pl.pallas_call(
            bilinear_decoder_kernel,
            out_shape=jax.ShapeDtypeStruct((C, E), out_dtype),
            grid_spec=pltpu.PrefetchScalarGridSpec(
                num_scalar_prefetch=0,
                grid=(n_blocks,),
                in_specs=[
                    pl.BlockSpec((D, tile), lambda i: (0, i)),   # u_eT tile
                    pl.BlockSpec((D, tile), lambda i: (0, i)),   # i_eT tile
                    wspec((S * D, D)),                            # stacked P weights
                    wspec((C, D)),                                # Q_W @ P_b
                    wspec((C, S)),                                # Q weight
                    wspec((C, 1)),                                # Q bias
                ],
                out_specs=pl.BlockSpec((C, tile), lambda i: (0, i)),
            ),
            compiler_params=pltpu.CompilerParams(
                dimension_semantics=("parallel",),
                vmem_limit_bytes=32 << 20),
        )(u_eT, i_eT, w_all, qwpb, qw, qb)

    try:
        out = _call(True)       # grid-invariant operands held in a single VMEM buffer
    except Exception:           # pipeline_mode unsupported on this jax: fall back
        out = _call(False)

    return out.T                # (E, C)


def ref_forward(src, dst, ufeats, ifeats, P_w, P_b, Q_w, Q_b):
    u_e = ufeats[src]
    i_e = ifeats[dst]
    scores = []
    for s in range(P_w.shape[0]):
        t = u_e @ P_w[s].T + P_b[s]
        scores.append(jnp.sum(t * i_e, axis=-1, keepdims=True))
    sc = jnp.concatenate(scores, axis=-1)
    if Q_w is None:
        return sc
    return sc @ Q_w.T + Q_b


if __name__ == "__main__":
    key = jax.random.PRNGKey(0)
    feats_dim = 32
    n_classes = 5
    n_basis = 3
    n_users, n_items = 6, 7
    n_edges = 16

    ks = jax.random.split(key, 8)
    ufeats = jax.random.normal(ks[0], (n_users, feats_dim), jnp.float32)
    ifeats = jax.random.normal(ks[1], (n_items, feats_dim), jnp.float32)
    src = jax.random.randint(ks[2], (n_edges,), 0, n_users)   # user end of edge
    dst = jax.random.randint(ks[3], (n_edges,), 0, n_items)   # item end of edge

    # deterministic parameter init (nn.Linear-style uniform bounds)
    bw = 1.0 / jnp.sqrt(feats_dim)
    P_w = jax.random.uniform(ks[4], (n_basis, feats_dim, feats_dim),
                             jnp.float32, -bw, bw)             # (S, out, in)
    P_b = jax.random.uniform(ks[5], (n_basis, feats_dim), jnp.float32, -bw, bw)
    bq = 1.0 / jnp.sqrt(n_basis)
    Q_w = jax.random.uniform(ks[6], (n_classes, n_basis), jnp.float32, -bq, bq)
    Q_b = jax.random.uniform(ks[7], (n_classes,), jnp.float32, -bq, bq)

    # n_basis branch (to_Q_r = nn.Linear)
    out = bilinear_decoder(src, dst, ufeats, ifeats, P_w, P_b, Q_w, Q_b)
    out = jax.block_until_ready(out)
    ref = ref_forward(src, dst, ufeats, ifeats, P_w, P_b, Q_w, Q_b)
    assert out.shape == (n_edges, n_classes)
    assert jnp.allclose(out, ref, rtol=1e-4, atol=1e-5)

    # n_basis=None branch (to_Q_r = nn.Identity)
    out_id = bilinear_decoder(src, dst, ufeats, ifeats, P_w, P_b, None, None)
    out_id = jax.block_until_ready(out_id)
    ref_id = ref_forward(src, dst, ufeats, ifeats, P_w, P_b, None, None)
    assert out_id.shape == (n_edges, n_basis)
    assert jnp.allclose(out_id, ref_id, rtol=1e-4, atol=1e-5)

    print("KERNEL_OK")
</pallas_src>

<mosaic_0001>
module attributes {stable_mosaic.version = 11 : i64} {
  func.func @bilinear_decoder_kernel(%arg0: i32, %arg1: memref<32x16xf32, #tpu.memory_space<vmem>>, %arg2: memref<32x16xf32, #tpu.memory_space<vmem>>, %arg3: memref<96x32xf32, #tpu.memory_space<vmem>>, %arg4: memref<5x32xf32, #tpu.memory_space<vmem>>, %arg5: memref<5x3xf32, #tpu.memory_space<vmem>>, %arg6: memref<5x1xf32, #tpu.memory_space<vmem>>, %arg7: memref<5x16xf32, #tpu.memory_space<vmem>>) attributes {dimension_semantics = [#tpu.dimension_semantics<parallel>], iteration_bounds = array<i64: 1>, scalar_prefetch = 0 : i64, scratch_operands = 0 : i64, tpu.core_type = #tpu.core_type<tc>, window_params = [{transform_indices = @transform_0, window_bounds = array<i64: 32, 16>}, {transform_indices = @transform_1, window_bounds = array<i64: 32, 16>}, {pipeline_mode = #tpu.pipeline_mode<synchronous>, transform_indices = @transform_2, window_bounds = array<i64: 96, 32>}, {pipeline_mode = #tpu.pipeline_mode<synchronous>, transform_indices = @transform_3, window_bounds = array<i64: 5, 32>}, {pipeline_mode = #tpu.pipeline_mode<synchronous>, transform_indices = @transform_4, window_bounds = array<i64: 5, 3>}, {pipeline_mode = #tpu.pipeline_mode<synchronous>, transform_indices = @transform_5, window_bounds = array<i64: 5, 1>}, {transform_indices = @transform_6, window_bounds = array<i64: 5, 16>}]} {
    %c0 = arith.constant 0 : index
    %c0_0 = arith.constant 0 : index
    %0 = vector.load %arg1[%c0, %c0_0] : memref<32x16xf32, #tpu.memory_space<vmem>>, vector<32x16xf32>
    %c0_1 = arith.constant 0 : index
    %c0_2 = arith.constant 0 : index
    %1 = vector.load %arg2[%c0_1, %c0_2] : memref<32x16xf32, #tpu.memory_space<vmem>>, vector<32x16xf32>
    %c0_3 = arith.constant 0 : index
    %c0_4 = arith.constant 0 : index
    %2 = vector.load %arg3[%c0_3, %c0_4] : memref<96x32xf32, #tpu.memory_space<vmem>>, vector<96x32xf32>
    %cst = arith.constant dense<0.000000e+00> : vector<96x16xf32>
    %3 = tpu.matmul %2, %0, %cst {dimension_numbers = #tpu.dot_dimension_numbers<[1], [0], [0], [1], [0, 0, 1, 1], [], []>} : vector<96x32xf32>, vector<32x16xf32>, vector<96x16xf32> -> vector<96x16xf32>
    %c0_5 = arith.constant 0 : index
    %c0_6 = arith.constant 0 : index
    %4 = vector.load %arg4[%c0_5, %c0_6] : memref<5x32xf32, #tpu.memory_space<vmem>>, vector<5x32xf32>
    %cst_7 = arith.constant dense<0.000000e+00> : vector<5x16xf32>
    %5 = tpu.matmul %4, %1, %cst_7 {dimension_numbers = #tpu.dot_dimension_numbers<[1], [0], [0], [1], [0, 0, 1, 1], [], []>} : vector<5x32xf32>, vector<32x16xf32>, vector<5x16xf32> -> vector<5x16xf32>
    %c0_8 = arith.constant 0 : index
    %c0_9 = arith.constant 0 : index
    %6 = vector.load %arg6[%c0_8, %c0_9] : memref<5x1xf32, #tpu.memory_space<vmem>>, vector<5x1xf32>
    %7 = vector.broadcast %6 : vector<5x1xf32> to vector<5x16xf32>
    %8 = arith.addf %5, %7 : vector<5x16xf32>
    %c0_10 = arith.constant 0 : index
    %c0_11 = arith.constant 0 : index
    %9 = vector.load %arg5[%c0_10, %c0_11] : memref<5x3xf32, #tpu.memory_space<vmem>>, vector<5x3xf32>
    %10 = vector.extract_strided_slice %3 {offsets = [0, 0], sizes = [32, 16], strides = [1, 1]} : vector<96x16xf32> to vector<32x16xf32>
    %11 = arith.mulf %10, %1 : vector<32x16xf32>
    %cst_12 = arith.constant dense<0.000000e+00> : vector<16xf32>
    %12 = vector.multi_reduction <add>, %11, %cst_12 [0] : vector<32x16xf32> to vector<16xf32>
    %13 = vector.shape_cast %12 : vector<16xf32> to vector<1x16xf32>
    %14 = vector.extract_strided_slice %9 {offsets = [0, 0], sizes = [5, 1], strides = [1, 1]} : vector<5x3xf32> to vector<5x1xf32>
    %15 = vector.broadcast %14 : vector<5x1xf32> to vector<5x16xf32>
    %16 = vector.broadcast %13 : vector<1x16xf32> to vector<5x16xf32>
    %17 = arith.mulf %15, %16 : vector<5x16xf32>
    %18 = arith.addf %8, %17 : vector<5x16xf32>
    %19 = vector.extract_strided_slice %3 {offsets = [32, 0], sizes = [32, 16], strides = [1, 1]} : vector<96x16xf32> to vector<32x16xf32>
    %20 = arith.mulf %19, %1 : vector<32x16xf32>
    %cst_13 = arith.constant dense<0.000000e+00> : vector<16xf32>
    %21 = vector.multi_reduction <add>, %20, %cst_13 [0] : vector<32x16xf32> to vector<16xf32>
    %22 = vector.shape_cast %21 : vector<16xf32> to vector<1x16xf32>
    %23 = vector.extract_strided_slice %9 {offsets = [0, 1], sizes = [5, 1], strides = [1, 1]} : vector<5x3xf32> to vector<5x1xf32>
    %24 = vector.broadcast %23 : vector<5x1xf32> to vector<5x16xf32>
    %25 = vector.broadcast %22 : vector<1x16xf32> to vector<5x16xf32>
    %26 = arith.mulf %24, %25 : vector<5x16xf32>
    %27 = arith.addf %18, %26 : vector<5x16xf32>
    %28 = vector.extract_strided_slice %3 {offsets = [64, 0], sizes = [32, 16], strides = [1, 1]} : vector<96x16xf32> to vector<32x16xf32>
    %29 = arith.mulf %28, %1 : vector<32x16xf32>
    %cst_14 = arith.constant dense<0.000000e+00> : vector<16xf32>
    %30 = vector.multi_reduction <add>, %29, %cst_14 [0] : vector<32x16xf32> to vector<16xf32>
    %31 = vector.shape_cast %30 : vector<16xf32> to vector<1x16xf32>
    %32 = vector.extract_strided_slice %9 {offsets = [0, 2], sizes = [5, 1], strides = [1, 1]} : vector<5x3xf32> to vector<5x1xf32>
    %33 = vector.broadcast %32 : vector<5x1xf32> to vector<5x16xf32>
    %34 = vector.broadcast %31 : vector<1x16xf32> to vector<5x16xf32>
    %35 = arith.mulf %33, %34 : vector<5x16xf32>
    %36 = arith.addf %27, %35 : vector<5x16xf32>
    %c0_15 = arith.constant 0 : index
    %c0_16 = arith.constant 0 : index
    %37 = vector.load %arg7[%c0_15, %c0_16] : memref<5x16xf32, #tpu.memory_space<vmem>>, vector<5x16xf32>
    tpu.vector_store %arg7[%c0_15, %c0_16], %36 {strides = array<i32>} : memref<5x16xf32, #tpu.memory_space<vmem>>, vector<5x16xf32>,
    return
  }
  func.func @transform_0(%arg0: i32) -> (i32, i32) {
    %c0_i32 = arith.constant 0 : i32
    %c0_i32_0 = arith.constant 0 : i32
    return %c0_i32, %arg0 : i32, i32
  }
  func.func @transform_1(%arg0: i32) -> (i32, i32) {
    %c0_i32 = arith.constant 0 : i32
    %c0_i32_0 = arith.constant 0 : i32
    return %c0_i32, %arg0 : i32, i32
  }
  func.func @transform_2(%arg0: i32) -> (i32, i32) {
    %c0_i32 = arith.constant 0 : i32
    %c0_i32_0 = arith.constant 0 : i32
    %c0_i32_1 = arith.constant 0 : i32
    return %c0_i32, %c0_i32_0 : i32, i32
  }
  func.func @transform_3(%arg0: i32) -> (i32, i32) {
    %c0_i32 = arith.constant 0 : i32
    %c0_i32_0 = arith.constant 0 : i32
    %c0_i32_1 = arith.constant 0 : i32
    return %c0_i32, %c0_i32_0 : i32, i32
  }
  func.func @transform_4(%arg0: i32) -> (i32, i32) {
    %c0_i32 = arith.constant 0 : i32
    %c0_i32_0 = arith.constant 0 : i32
    %c0_i32_1 = arith.constant 0 : i32
    return %c0_i32, %c0_i32_0 : i32, i32
  }
  func.func @transform_5(%arg0: i32) -> (i32, i32) {
    %c0_i32 = arith.constant 0 : i32
    %c0_i32_0 = arith.constant 0 : i32
    %c0_i32_1 = arith.constant 0 : i32
    return %c0_i32, %c0_i32_0 : i32, i32
  }
  func.func @transform_6(%arg0: i32) -> (i32, i32) {
    %c0_i32 = arith.constant 0 : i32
    %c0_i32_0 = arith.constant 0 : i32
    return %c0_i32, %arg0 : i32, i32
  }
}

module attributes {stable_mosaic.version = 11 : i64} {
  func.func @bilinear_decoder_kernel(%arg0: i32, %arg1: memref<32x16xf32, #tpu.memory_space<vmem>>, %arg2: memref<32x16xf32, #tpu.memory_space<vmem>>, %arg3: memref<96x32xf32, #tpu.memory_space<vmem>>, %arg4: memref<5x32xf32, #tpu.memory_space<vmem>>, %arg5: memref<5x3xf32, #tpu.memory_space<vmem>>, %arg6: memref<5x1xf32, #tpu.memory_space<vmem>>, %arg7: memref<5x16xf32, #tpu.memory_space<vmem>>) attributes {dimension_semantics = [#tpu.dimension_semantics<parallel>], iteration_bounds = array<i64: 1>, scalar_prefetch = 0 : i64, scratch_operands = 0 : i64, tpu.core_type = #tpu.core_type<tc>, window_params = [{transform_indices = @transform_0, window_bounds = array<i64: 32, 16>}, {transform_indices = @transform_1, window_bounds = array<i64: 32, 16>}, {pipeline_mode = #tpu.pipeline_mode<synchronous>, transform_indices = @transform_2, window_bounds = array<i64: 96, 32>}, {pipeline_mode = #tpu.pipeline_mode<synchronous>, transform_indices = @transform_3, window_bounds = array<i64: 5, 32>}, {pipeline_mode = #tpu.pipeline_mode<synchronous>, transform_indices = @transform_4, window_bounds = array<i64: 5, 3>}, {pipeline_mode = #tpu.pipeline_mode<synchronous>, transform_indices = @transform_5, window_bounds = array<i64: 5, 1>}, {transform_indices = @transform_6, window_bounds = array<i64: 5, 16>}]} {
    %c0 = arith.constant 0 : index
    %c0_0 = arith.constant 0 : index
    %0 = vector.load %arg1[%c0, %c0_0] : memref<32x16xf32, #tpu.memory_space<vmem>>, vector<32x16xf32>
    %c0_1 = arith.constant 0 : index
    %c0_2 = arith.constant 0 : index
    %1 = vector.load %arg2[%c0_1, %c0_2] : memref<32x16xf32, #tpu.memory_space<vmem>>, vector<32x16xf32>
    %c0_3 = arith.constant 0 : index
    %c0_4 = arith.constant 0 : index
    %2 = vector.load %arg3[%c0_3, %c0_4] : memref<96x32xf32, #tpu.memory_space<vmem>>, vector<96x32xf32>
    %cst = arith.constant dense<0.000000e+00> : vector<96x16xf32>
    %3 = tpu.matmul %2, %0, %cst {dimension_numbers = #tpu.dot_dimension_numbers<[1], [0], [0], [1], [0, 0, 1, 1], [], []>} : vector<96x32xf32>, vector<32x16xf32>, vector<96x16xf32> -> vector<96x16xf32>
    %c0_5 = arith.constant 0 : index
    %c0_6 = arith.constant 0 : index
    %4 = vector.load %arg4[%c0_5, %c0_6] : memref<5x32xf32, #tpu.memory_space<vmem>>, vector<5x32xf32>
    %cst_7 = arith.constant dense<0.000000e+00> : vector<5x16xf32>
    %5 = tpu.matmul %4, %1, %cst_7 {dimension_numbers = #tpu.dot_dimension_numbers<[1], [0], [0], [1], [0, 0, 1, 1], [], []>} : vector<5x32xf32>, vector<32x16xf32>, vector<5x16xf32> -> vector<5x16xf32>
    %c0_8 = arith.constant 0 : index
    %c0_9 = arith.constant 0 : index
    %6 = vector.load %arg6[%c0_8, %c0_9] : memref<5x1xf32, #tpu.memory_space<vmem>>, vector<5x1xf32>
    %7 = vector.broadcast %6 : vector<5x1xf32> to vector<5x16xf32>
    %8 = arith.addf %5, %7 : vector<5x16xf32>
    %c0_10 = arith.constant 0 : index
    %c0_11 = arith.constant 0 : index
    %9 = vector.load %arg5[%c0_10, %c0_11] : memref<5x3xf32, #tpu.memory_space<vmem>>, vector<5x3xf32>
    %10 = vector.extract_strided_slice %3 {offsets = [0, 0], sizes = [32, 16], strides = [1, 1]} : vector<96x16xf32> to vector<32x16xf32>
    %11 = arith.mulf %10, %1 : vector<32x16xf32>
    %cst_12 = arith.constant dense<0.000000e+00> : vector<16xf32>
    %12 = vector.multi_reduction <add>, %11, %cst_12 [0] : vector<32x16xf32> to vector<16xf32>
    %13 = vector.shape_cast %12 : vector<16xf32> to vector<1x16xf32>
    %14 = vector.extract_strided_slice %9 {offsets = [0, 0], sizes = [5, 1], strides = [1, 1]} : vector<5x3xf32> to vector<5x1xf32>
    %15 = vector.broadcast %14 : vector<5x1xf32> to vector<5x16xf32>
    %16 = vector.broadcast %13 : vector<1x16xf32> to vector<5x16xf32>
    %17 = arith.mulf %15, %16 : vector<5x16xf32>
    %18 = arith.addf %8, %17 : vector<5x16xf32>
    %19 = vector.extract_strided_slice %3 {offsets = [32, 0], sizes = [32, 16], strides = [1, 1]} : vector<96x16xf32> to vector<32x16xf32>
    %20 = arith.mulf %19, %1 : vector<32x16xf32>
    %cst_13 = arith.constant dense<0.000000e+00> : vector<16xf32>
    %21 = vector.multi_reduction <add>, %20, %cst_13 [0] : vector<32x16xf32> to vector<16xf32>
    %22 = vector.shape_cast %21 : vector<16xf32> to vector<1x16xf32>
    %23 = vector.extract_strided_slice %9 {offsets = [0, 1], sizes = [5, 1], strides = [1, 1]} : vector<5x3xf32> to vector<5x1xf32>
    %24 = vector.broadcast %23 : vector<5x1xf32> to vector<5x16xf32>
    %25 = vector.broadcast %22 : vector<1x16xf32> to vector<5x16xf32>
    %26 = arith.mulf %24, %25 : vector<5x16xf32>
    %27 = arith.addf %18, %26 : vector<5x16xf32>
    %28 = vector.extract_strided_slice %3 {offsets = [64, 0], sizes = [32, 16], strides = [1, 1]} : vector<96x16xf32> to vector<32x16xf32>
    %29 = arith.mulf %28, %1 : vector<32x16xf32>
    %cst_14 = arith.constant dense<0.000000e+00> : vector<16xf32>
    %30 = vector.multi_reduction <add>, %29, %cst_14 [0] : vector<32x16xf32> to vector<16xf32>
    %31 = vector.shape_cast %30 : vector<16xf32> to vector<1x16xf32>
    %32 = vector.extract_strided_slice %9 {offsets = [0, 2], sizes = [5, 1], strides = [1, 1]} : vector<5x3xf32> to vector<5x1xf32>
    %33 = vector.broadcast %32 : vector<5x1xf32> to vector<5x16xf32>
    %34 = vector.broadcast %31 : vector<1x16xf32> to vector<5x16xf32>
    %35 = arith.mulf %33, %34 : vector<5x16xf32>
    %36 = arith.addf %27, %35 : vector<5x16xf32>
    %c0_15 = arith.constant 0 : index
    %c0_16 = arith.constant 0 : index
    %37 = vector.load %arg7[%c0_15, %c0_16] : memref<5x16xf32, #tpu.memory_space<vmem>>, vector<5x16xf32>
    tpu.vector_store %arg7[%c0_15, %c0_16], %36 {strides = array<i32>} : memref<5x16xf32, #tpu.memory_space<vmem>>, vector<5x16xf32>,
    return
  }
  func.func @transform_0(%arg0: i32) -> (i32, i32) {
    %c0_i32 = arith.constant 0 : i32
    %c0_i32_0 = arith.constant 0 : i32
    return %c0_i32, %arg0 : i32, i32
  }
  func.func @transform_1(%arg0: i32) -> (i32, i32) {
    %c0_i32 = arith.constant 0 : i32
    %c0_i32_0 = arith.constant 0 : i32
    return %c0_i32, %arg0 : i32, i32
  }
  func.func @transform_2(%arg0: i32) -> (i32, i32) {
    %c0_i32 = arith.constant 0 : i32
    %c0_i32_0 = arith.constant 0 : i32
    %c0_i32_1 = arith.constant 0 : i32
    return %c0_i32, %c0_i32_0 : i32, i32
  }
  func.func @transform_3(%arg0: i32) -> (i32, i32) {
    %c0_i32 = arith.constant 0 : i32
    %c0_i32_0 = arith.constant 0 : i32
    %c0_i32_1 = arith.constant 0 : i32
    return %c0_i32, %c0_i32_0 : i32, i32
  }
  func.func @transform_4(%arg0: i32) -> (i32, i32) {
    %c0_i32 = arith.constant 0 : i32
    %c0_i32_0 = arith.constant 0 : i32
    %c0_i32_1 = arith.constant 0 : i32
    return %c0_i32, %c0_i32_0 : i32, i32
  }
  func.func @transform_5(%arg0: i32) -> (i32, i32) {
    %c0_i32 = arith.constant 0 : i32
    %c0_i32_0 = arith.constant 0 : i32
    %c0_i32_1 = arith.constant 0 : i32
    return %c0_i32, %c0_i32_0 : i32, i32
  }
  func.func @transform_6(%arg0: i32) -> (i32, i32) {
    %c0_i32 = arith.constant 0 : i32
    %c0_i32_0 = arith.constant 0 : i32
    return %c0_i32, %arg0 : i32, i32
  }
}

</mosaic_0001>

<llo_original>
// kernel: tpu_custom_call.1
$region0: #{tpu_custom_call.1}
  #allocation0 [shape = 'u32[]', space=smem, size = 0x4, offset = 0x4, fixed_abs, tag = 'smem constant byte address 0x4 - core index']
  #allocation1 [shape = 'u32[144,128]{1,0:T(1,128)}', space=vmem, size = 0x12000, scoped, tag = 'internal scratch']
  %s0 = inlined_call_operand.vmem [shape: f32[32,16], index: 0, kind: input, shape index: {}]
  %s1 = inlined_call_operand.vmem [shape: f32[32,16], index: 1, kind: input, shape index: {}]
  %s2 = inlined_call_operand.vmem [shape: f32[96,32], index: 2, kind: input, shape index: {}]
  %s3 = inlined_call_operand.vmem [shape: f32[5,32], index: 3, kind: input, shape index: {}]
  %s4 = inlined_call_operand.vmem [shape: f32[5,3], index: 4, kind: input, shape index: {}]
  %s5 = inlined_call_operand.vmem [shape: f32[5,1], index: 5, kind: input, shape index: {}]
  %s6 = inlined_call_operand.hbm [shape: f32[5,16], index: 6, kind: output, shape index: {}]
  %s7 = sld [smem:[#allocation0]]
  $region34: #{tpu_custom_call.1} parent=0
    _
  %s9 = ssub.s32 1, %s7
  %s10 = scalar_select 0, %s9, %s7
  $region1: #{tpu_custom_call.1} parent=0
    #allocation2 [shape = 'u8[4096]{0}', space=vmem, size = 0x1000, scoped, tag = 'output window, operand 0, single buffered']
    #allocation3 [shape = 's32[1]{0}', space=sflag, size = 0x4, scoped, tag = 'scoped memory for tpu_custom_call.1']
    %11 = vsyncpa [#allocation3], 0
    // Predicated region
    $region2: #{tpu_custom_call.1} parent=1 // pred_check
      _
    $region3: #{tpu_custom_call.1} parent=1 // pred_check_branch
      %13 = sbr.rel (0) target = $region5
    $region4: #{tpu_custom_call.1} parent=1 // pred_region
      _
    $region5: #{tpu_custom_call.1} parent=1 // pred_fallthru
      _
    // Predicated region
    $region6: #{tpu_custom_call.1} parent=1 // pred_check
      _
    $region7: #{tpu_custom_call.1} parent=1 // pred_check_branch
      %15 = sbr.rel (0) target = $region9
    $region8: #{tpu_custom_call.1} parent=1 // pred_region
      _
    $region9: #{tpu_custom_call.1} parent=1 // pred_fallthru
      _
    // Predicated region
    $region10: #{tpu_custom_call.1} parent=1 // pred_check
      _
    $region11: #{tpu_custom_call.1} parent=1 // pred_check_branch
      %17 = sbr.rel (0) target = $region13
    $region12: #{tpu_custom_call.1} parent=1 // pred_region
      _
    $region13: #{tpu_custom_call.1} parent=1 // pred_fallthru
      _
    // Predicated region
    $region14: #{tpu_custom_call.1} parent=1 // pred_check
      _
    $region15: #{tpu_custom_call.1} parent=1 // pred_check_branch
      %19 = sbr.rel (0) target = $region17
    $region16: #{tpu_custom_call.1} parent=1 // pred_region
      _
    $region17: #{tpu_custom_call.1} parent=1 // pred_fallthru
      _
    // Predicated region
    $region18: #{tpu_custom_call.1} parent=1 // pred_check
      _
    $region19: #{tpu_custom_call.1} parent=1 // pred_check_branch
      %21 = sbr.rel (0) target = $region21
    $region20: #{tpu_custom_call.1} parent=1 // pred_region
      _
    $region21: #{tpu_custom_call.1} parent=1 // pred_fallthru
      _
    // Predicated region
    $region22: #{tpu_custom_call.1} parent=1 // pred_check
      _
    $region23: #{tpu_custom_call.1} parent=1 // pred_check_branch
      %23 = sbr.rel (0) target = $region25
    $region24: #{tpu_custom_call.1} parent=1 // pred_region
      _
    $region25: #{tpu_custom_call.1} parent=1 // pred_fallthru
      _
    %v24 = vld [vmem:[%s0] sm:$0xff]
    %v25 = vld [vmem:[%s0 + $0x8] sm:$0xff]
    %v26 = vld [vmem:[%s0 + $0x10] sm:$0xff]
    %v27 = vld [vmem:[%s0 + $0x18] sm:$0xff]
    %v28 = vld [vmem:[%s1] sm:$0xff]
    %v29 = vld [vmem:[%s1 + $0x8] sm:$0xff]
    %v30 = vld [vmem:[%s1 + $0x10] sm:$0xff]
    %v31 = vld [vmem:[%s1 + $0x18] sm:$0xff]
    %v32 = vld [vmem:[%s2] sm:$0xff]
    %v33 = vld [vmem:[%s2 + $0x8] sm:$0xff]
    %v34 = vld [vmem:[%s2 + $0x10] sm:$0xff]
    %v35 = vld [vmem:[%s2 + $0x18] sm:$0xff]
    %v36 = vld [vmem:[%s2 + $0x20] sm:$0xff]
    %v37 = vld [vmem:[%s2 + $0x28] sm:$0xff]
    %v38 = vld [vmem:[%s2 + $0x30] sm:$0xff]
    %v39 = vld [vmem:[%s2 + $0x38] sm:$0xff]
    %v40 = vld [vmem:[%s2 + $0x40] sm:$0xff]
    %v41 = vld [vmem:[%s2 + $0x48] sm:$0xff]
    %v42 = vld [vmem:[%s2 + $0x50] sm:$0xff]
    %v43 = vld [vmem:[%s2 + $0x58] sm:$0xff]
    %vm44 = vcmask 261120
    %v46 = vsel %vm44, %v32, 0
    %v49 = vsel %vm44, %v33, 0
    %v52 = vsel %vm44, %v34, 0
    %v55 = vsel %vm44, %v35, 0
    %v58 = vsel %vm44, %v36, 0
    %v61 = vsel %vm44, %v37, 0
    %v64 = vsel %vm44, %v38, 0
    %v67 = vsel %vm44, %v39, 0
    %v70 = vsel %vm44, %v40, 0
    %v73 = vsel %vm44, %v41, 0
    %v76 = vsel %vm44, %v42, 0
    %v79 = vsel %vm44, %v43, 0
    %81 = vmatprep.subr.mxu0 0.0
    %82 = vmatpush1.msra.mxu0 %v24
    %83 = vmatprep.subr.mxu0 0.0
    %84 = vmatpush1.msra.mxu0 %v25
    %85 = vmatprep.subr.mxu0 0.0
    %86 = vmatpush1.msra.mxu0 %v26
    %87 = vmatprep.subr.mxu0 0.0
    %88 = vmatpush1.msra.mxu0 %v27
    %89 = vmatprep.subr.mxu0 0.0
    %90 = vmatpush1.msra.mxu0 0.0
    %91 = vmatprep.subr.mxu0 0.0
    %92 = vmatpush1.msra.mxu0 0.0
    %93 = vmatprep.subr.mxu0 0.0
    %94 = vmatpush1.msra.mxu0 0.0
    %95 = vmatprep.subr.mxu0 0.0
    %96 = vmatpush1.msra.mxu0 0.0
    %97 = vmatprep.subr.mxu0 0.0
    %98 = vmatpush1.msra.mxu0 0.0
    %99 = vmatprep.subr.mxu0 0.0
    %100 = vmatpush1.msra.mxu0 0.0
    %101 = vmatprep.subr.mxu0 0.0
    %102 = vmatpush1.msra.mxu0 0.0
    %103 = vmatprep.subr.mxu0 0.0
    %104 = vmatpush1.msra.mxu0 0.0
    %105 = vmatprep.subr.mxu0 0.0
    %106 = vmatpush1.msra.mxu0 0.0
    %107 = vmatprep.subr.mxu0 0.0
    %108 = vmatpush1.msra.mxu0 0.0
    %109 = vmatprep.subr.mxu0 0.0
    %110 = vmatpush1.msra.mxu0 0.0
    %111 = vmatprep.subr.mxu0 0.0
    %112 = vmatpush1.msra.mxu0 0.0
    %113 = vmatprep.subr.mxu0 0.0
    %114 = vmatpush1.msra.mxu0 0.0
    %115 = vmatprep.subr.mxu0 0.0
    %116 = vmatpush1.msra.mxu0 0.0
    %117 = vmatprep.subr.mxu0 0.0
    %118 = vmatpush1.msra.mxu0 0.0
    %119 = vmatprep.subr.mxu0 0.0
    %120 = vmatpush1.msra.mxu0 0.0
    %121 = vmatprep.subr.mxu0 0.0
    %122 = vmatpush1.msra.mxu0 0.0
    %123 = vmatprep.subr.mxu0 0.0
    %124 = vmatpush1.msra.mxu0 0.0
    %125 = vmatprep.subr.mxu0 0.0
    %126 = vmatpush1.msra.mxu0 0.0
    %127 = vmatprep.subr.mxu0 0.0
    %128 = vmatpush1.msra.mxu0 0.0
    %129 = vmatprep.subr.mxu0 0.0
    %130 = vmatpush1.msra.mxu0 0.0
    %131 = vmatprep.subr.mxu0 0.0
    %132 = vmatpush1.msra.mxu0 0.0
    %133 = vmatprep.subr.mxu0 0.0
    %134 = vmatpush1.msra.mxu0 0.0
    %135 = vmatprep.subr.mxu0 0.0
    %136 = vmatpush1.msra.mxu0 0.0
    %137 = vmatprep.subr.mxu0 0.0
    %138 = vmatpush1.msra.mxu0 0.0
    %139 = vmatprep.subr.mxu0 0.0
    %140 = vmatpush1.msra.mxu0 0.0
    %141 = vmatprep.subr.mxu0 0.0
    %142 = vmatpush1.msra.mxu0 0.0
    %143 = vmatprep.subr.mxu0 0.0
    %144 = vmatpush1.msra.mxu0 0.0
    %145 = vmatprep.mubr.f32.mxu0 0.0
    %146 = vmatmul.mubr.f32.gmra.mrb[0].mxu0 %v46
    %v147 = vpop.f32.mrb[0].mxu0
    %v148 = vadd.f32 0.0, %v147
    %v149 = vpop.f32.mrb[0].mxu0
    %150 = vmatprep.mubr.f32.mxu0 0.0
    %151 = vmatmul.mubr.f32.gmra.mrb[0].mxu0 %v49
    %v152 = vpop.f32.mrb[0].mxu0
    %v153 = vadd.f32 0.0, %v152
    %v154 = vpop.f32.mrb[0].mxu0
    %155 = vmatprep.mubr.f32.mxu0 0.0
    %156 = vmatmul.mubr.f32.gmra.mrb[0].mxu0 %v52
    %v157 = vpop.f32.mrb[0].mxu0
    %v158 = vadd.f32 0.0, %v157
    %v159 = vpop.f32.mrb[0].mxu0
    %160 = vmatprep.mubr.f32.mxu0 0.0
    %161 = vmatmul.mubr.f32.gmra.mrb[0].mxu0 %v55
    %v162 = vpop.f32.mrb[0].mxu0
    %v163 = vadd.f32 0.0, %v162
    %v164 = vpop.f32.mrb[0].mxu0
    %165 = vmatprep.mubr.f32.mxu0 0.0
    %166 = vmatmul.mubr.f32.gmra.mrb[0].mxu0 %v58
    %v167 = vpop.f32.mrb[0].mxu0
    %v168 = vadd.f32 0.0, %v167
    %v169 = vpop.f32.mrb[0].mxu0
    %170 = vmatprep.mubr.f32.mxu0 0.0
    %171 = vmatmul.mubr.f32.gmra.mrb[0].mxu0 %v61
    %v172 = vpop.f32.mrb[0].mxu0
    %v173 = vadd.f32 0.0, %v172
    %v174 = vpop.f32.mrb[0].mxu0
    %175 = vmatprep.mubr.f32.mxu0 0.0
    %176 = vmatmul.mubr.f32.gmra.mrb[0].mxu0 %v64
    %v177 = vpop.f32.mrb[0].mxu0
    %v178 = vadd.f32 0.0, %v177
    %v179 = vpop.f32.mrb[0].mxu0
    %180 = vmatprep.mubr.f32.mxu0 0.0
    %181 = vmatmul.mubr.f32.gmra.mrb[0].mxu0 %v67
    %v182 = vpop.f32.mrb[0].mxu0
    %v183 = vadd.f32 0.0, %v182
    %v184 = vpop.f32.mrb[0].mxu0
    %185 = vmatprep.mubr.f32.mxu0 0.0
    %186 = vmatmul.mubr.f32.gmra.mrb[0].mxu0 %v70
    %v187 = vpop.f32.mrb[0].mxu0
    %v188 = vadd.f32 0.0, %v187
    %v189 = vpop.f32.mrb[0].mxu0
    %190 = vmatprep.mubr.f32.mxu0 0.0
    %191 = vmatmul.mubr.f32.gmra.mrb[0].mxu0 %v73
    %v192 = vpop.f32.mrb[0].mxu0
    %v193 = vadd.f32 0.0, %v192
    %v194 = vpop.f32.mrb[0].mxu0
    %195 = vmatprep.mubr.f32.mxu0 0.0
    %196 = vmatmul.mubr.f32.gmra.mrb[0].mxu0 %v76
    %v197 = vpop.f32.mrb[0].mxu0
    %v198 = vadd.f32 0.0, %v197
    %v199 = vpop.f32.mrb[0].mxu0
    %200 = vmatprep.mubr.f32.mxu0 0.0
    %201 = vmatmul.mubr.f32.gmra.mrb[0].mxu0 %v79
    %v202 = vpop.f32.mrb[0].mxu0
    %v203 = vadd.f32 0.0, %v202
    %v204 = vpop.f32.mrb[0].mxu0
    %205 = vdwg.mxu0
    %v206 = vld [vmem:[%s3] sm:$0x1f]
    %v207 = vld [vmem:[%s5] sm:$0x1f]
    %209 = vset.pattern.permute.xlu0 0
    %210 = vperm.xlu0 %209, %v207
    %v211 = vpop.permute.xlu0 %210
    %v214 = vsel %vm44, %v206, 0
    %216 = vmatprep.subr.mxu0 0.0
    %217 = vmatpush1.msra.mxu0 %v28
    %218 = vmatprep.subr.mxu0 0.0
    %219 = vmatpush1.msra.mxu0 %v29
    %220 = vmatprep.subr.mxu0 0.0
    %221 = vmatpush1.msra.mxu0 %v30
    %222 = vmatprep.subr.mxu0 0.0
    %223 = vmatpush1.msra.mxu0 %v31
    %224 = vmatprep.subr.mxu0 0.0
    %225 = vmatpush1.msra.mxu0 0.0
    %226 = vmatprep.subr.mxu0 0.0
    %227 = vmatpush1.msra.mxu0 0.0
    %228 = vmatprep.subr.mxu0 0.0
    %229 = vmatpush1.msra.mxu0 0.0
    %230 = vmatprep.subr.mxu0 0.0
    %231 = vmatpush1.msra.mxu0 0.0
    %232 = vmatprep.subr.mxu0 0.0
    %233 = vmatpush1.msra.mxu0 0.0
    %234 = vmatprep.subr.mxu0 0.0
    %235 = vmatpush1.msra.mxu0 0.0
    %236 = vmatprep.subr.mxu0 0.0
    %237 = vmatpush1.msra.mxu0 0.0
    %238 = vmatprep.subr.mxu0 0.0
    %239 = vmatpush1.msra.mxu0 0.0
    %240 = vmatprep.subr.mxu0 0.0
    %241 = vmatpush1.msra.mxu0 0.0
    %242 = vmatprep.subr.mxu0 0.0
    %243 = vmatpush1.msra.mxu0 0.0
    %244 = vmatprep.subr.mxu0 0.0
    %245 = vmatpush1.msra.mxu0 0.0
    %246 = vmatprep.subr.mxu0 0.0
    %247 = vmatpush1.msra.mxu0 0.0
    %248 = vmatprep.subr.mxu0 0.0
    %249 = vmatpush1.msra.mxu0 0.0
    %250 = vmatprep.subr.mxu0 0.0
    %251 = vmatpush1.msra.mxu0 0.0
    %252 = vmatprep.subr.mxu0 0.0
    %253 = vmatpush1.msra.mxu0 0.0
    %254 = vmatprep.subr.mxu0 0.0
    %255 = vmatpush1.msra.mxu0 0.0
    %256 = vmatprep.subr.mxu0 0.0
    %257 = vmatpush1.msra.mxu0 0.0
    %258 = vmatprep.subr.mxu0 0.0
    %259 = vmatpush1.msra.mxu0 0.0
    %260 = vmatprep.subr.mxu0 0.0
    %261 = vmatpush1.msra.mxu0 0.0
    %262 = vmatprep.subr.mxu0 0.0
    %263 = vmatpush1.msra.mxu0 0.0
    %264 = vmatprep.subr.mxu0 0.0
    %265 = vmatpush1.msra.mxu0 0.0
    %266 = vmatprep.subr.mxu0 0.0
    %267 = vmatpush1.msra.mxu0 0.0
    %268 = vmatprep.subr.mxu0 0.0
    %269 = vmatpush1.msra.mxu0 0.0
    %270 = vmatprep.subr.mxu0 0.0
    %271 = vmatpush1.msra.mxu0 0.0
    %272 = vmatprep.subr.mxu0 0.0
    %273 = vmatpush1.msra.mxu0 0.0
    %274 = vmatprep.subr.mxu0 0.0
    %275 = vmatpush1.msra.mxu0 0.0
    %276 = vmatprep.subr.mxu0 0.0
    %277 = vmatpush1.msra.mxu0 0.0
    %278 = vmatprep.subr.mxu0 0.0
    %279 = vmatpush1.msra.mxu0 0.0
    %280 = vmatprep.mubr.f32.mxu0 0.0
    %281 = vmatmul.mubr.f32.gmra.mrb[0].mxu0 %v214
    %v282 = vpop.f32.mrb[0].mxu0
    %v283 = vadd.f32 %v211, %v282
    %v284 = vpop.f32.mrb[0].mxu0
    %285 = vdwg.mxu0
    %v286 = vld [vmem:[%s4] sm:$0x1f]
    %v287 = vmul.f32 %v148, %v28
    %v288 = vmul.f32 %v153, %v29
    %v289 = vmul.f32 %v158, %v30
    %v290 = vmul.f32 %v163, %v31
    %vm291 = vcmask 130048
    %v292 = vsel %vm291, %v287, 0.0
    %v293 = vsel %vm291, %v288, 0.0
    %v294 = vadd.f32 %v292, %v293
    %v295 = vsel %vm291, %v289, 0.0
    %v296 = vadd.f32 %v294, %v295
    %v297 = vsel %vm291, %v290, 0.0
    %v298 = vadd.f32 %v296, %v297
    %v299 = vrot.slane %v298, 4
    %v300 = vadd.f32 %v298, %v299
    %v301 = vrot.slane %v300, 2
    %v302 = vadd.f32 %v300, %v301
    %v303 = vrot.slane %v302, 1
    %v304 = vadd.f32 %v302, %v303
    %306 = vset.pattern.permute.xlu0 0
    %307 = vperm.xlu0 %306, %v286
    %v308 = vpop.permute.xlu0 %307
    %v310 = vmul.f32 %v308, %v304
    %v311 = vadd.f32 %v283, %v310
    %v312 = vmul.f32 %v168, %v28
    %v313 = vmul.f32 %v173, %v29
    %v314 = vmul.f32 %v178, %v30
    %v315 = vmul.f32 %v183, %v31
    %v316 = vsel %vm291, %v312, 0.0
    %v317 = vsel %vm291, %v313, 0.0
    %v318 = vadd.f32 %v316, %v317
    %v319 = vsel %vm291, %v314, 0.0
    %v320 = vadd.f32 %v318, %v319
    %v321 = vsel %vm291, %v315, 0.0
    %v322 = vadd.f32 %v320, %v321
    %v323 = vrot.slane %v322, 4
    %v324 = vadd.f32 %v322, %v323
    %v325 = vrot.slane %v324, 2
    %v326 = vadd.f32 %v324, %v325
    %v327 = vrot.slane %v326, 1
    %v328 = vadd.f32 %v326, %v327
    %329 = vset.pattern.permute.xlu0 1
    %330 = vperm.xlu0 %329, %v286
    %v331 = vpop.permute.xlu0 %330
    %v333 = vmul.f32 %v331, %v328
    %v334 = vadd.f32 %v311, %v333
    %v335 = vmul.f32 %v188, %v28
    %v336 = vmul.f32 %v193, %v29
    %v337 = vmul.f32 %v198, %v30
    %v338 = vmul.f32 %v203, %v31
    %v339 = vsel %vm291, %v335, 0.0
    %v340 = vsel %vm291, %v336, 0.0
    %v341 = vadd.f32 %v339, %v340
    %v342 = vsel %vm291, %v337, 0.0
    %v343 = vadd.f32 %v341, %v342
    %v344 = vsel %vm291, %v338, 0.0
    %v345 = vadd.f32 %v343, %v344
    %v346 = vrot.slane %v345, 4
    %v347 = vadd.f32 %v345, %v346
    %v348 = vrot.slane %v347, 2
    %v349 = vadd.f32 %v347, %v348
    %v350 = vrot.slane %v349, 1
    %v351 = vadd.f32 %v349, %v350
    %352 = vset.pattern.permute.xlu0 2
    %353 = vperm.xlu0 %352, %v286
    %v354 = vpop.permute.xlu0 %353
    %v356 = vmul.f32 %v354, %v351
    %v357 = vadd.f32 %v334, %v356
    %vm358 = vcmask 126976
    %359 = vst.msk [vmem:[#allocation2] sm:$0x1f] %vm358, %v357
    // Predicated region
    $region26: #{tpu_custom_call.1} parent=1 // pred_check
      _
    $region27: #{tpu_custom_call.1} parent=1 // pred_check_branch
      %361 = sbr.rel (0) target = $region29
    $region28: #{tpu_custom_call.1} parent=1 // pred_region
      %s363 = ssub.s32 128, 128
      %364 = vsyncadd [#allocation3], %s363
      %s366 = sshll.u32 [#allocation2], 4
      %s367 = int_to_ptr.vmem [resolvable:$true] %s366
      %369 = dma.vmem_to_hbm [thread:$0]  %s367, 128, %s6, [#allocation3]
    $region29: #{tpu_custom_call.1} parent=1 // pred_fallthru
      _
    // Predicated region
    $region30: #{tpu_custom_call.1} parent=1 // pred_check
      _
    $region31: #{tpu_custom_call.1} parent=1 // pred_check_branch
      %371 = sbr.rel (0) target = $region33
    $region32: #{tpu_custom_call.1} parent=1 // pred_region
      %372 = dma.done [#allocation3], 128
    $region33: #{tpu_custom_call.1} parent=1 // pred_fallthru
      _
    %373 = vsyncpa [#allocation3], 1

// kernel: tpu_custom_call.1
$region0: #{tpu_custom_call.1}
  #allocation0 [shape = 'u32[]', space=smem, size = 0x4, offset = 0x4, fixed_abs, tag = 'smem constant byte address 0x4 - core index']
  #allocation1 [shape = 'u32[144,128]{1,0:T(1,128)}', space=vmem, size = 0x12000, scoped, tag = 'internal scratch']
  %s0 = inlined_call_operand.vmem [shape: f32[32,16], index: 0, kind: input, shape index: {}]
  %s1 = inlined_call_operand.vmem [shape: f32[32,16], index: 1, kind: input, shape index: {}]
  %s2 = inlined_call_operand.vmem [shape: f32[96,32], index: 2, kind: input, shape index: {}]
  %s3 = inlined_call_operand.vmem [shape: f32[5,32], index: 3, kind: input, shape index: {}]
  %s4 = inlined_call_operand.vmem [shape: f32[5,3], index: 4, kind: input, shape index: {}]
  %s5 = inlined_call_operand.vmem [shape: f32[5,1], index: 5, kind: input, shape index: {}]
  %s6 = inlined_call_operand.hbm [shape: f32[5,16], index: 6, kind: output, shape index: {}]
  %s7 = sld [smem:[#allocation0]]
  $region34: #{tpu_custom_call.1} parent=0
    _
  %s9 = ssub.s32 1, %s7
  %s10 = scalar_select 0, %s9, %s7
  $region1: #{tpu_custom_call.1} parent=0
    #allocation2 [shape = 'u8[4096]{0}', space=vmem, size = 0x1000, scoped, tag = 'output window, operand 0, single buffered']
    #allocation3 [shape = 's32[1]{0}', space=sflag, size = 0x4, scoped, tag = 'scoped memory for tpu_custom_call.1']
    %11 = vsyncpa [#allocation3], 0
    // Predicated region
    $region2: #{tpu_custom_call.1} parent=1 // pred_check
      _
    $region3: #{tpu_custom_call.1} parent=1 // pred_check_branch
      %13 = sbr.rel (0) target = $region5
    $region4: #{tpu_custom_call.1} parent=1 // pred_region
      _
    $region5: #{tpu_custom_call.1} parent=1 // pred_fallthru
      _
    // Predicated region
    $region6: #{tpu_custom_call.1} parent=1 // pred_check
      _
    $region7: #{tpu_custom_call.1} parent=1 // pred_check_branch
      %15 = sbr.rel (0) target = $region9
    $region8: #{tpu_custom_call.1} parent=1 // pred_region
      _
    $region9: #{tpu_custom_call.1} parent=1 // pred_fallthru
      _
    // Predicated region
    $region10: #{tpu_custom_call.1} parent=1 // pred_check
      _
    $region11: #{tpu_custom_call.1} parent=1 // pred_check_branch
      %17 = sbr.rel (0) target = $region13
    $region12: #{tpu_custom_call.1} parent=1 // pred_region
      _
    $region13: #{tpu_custom_call.1} parent=1 // pred_fallthru
      _
    // Predicated region
    $region14: #{tpu_custom_call.1} parent=1 // pred_check
      _
    $region15: #{tpu_custom_call.1} parent=1 // pred_check_branch
      %19 = sbr.rel (0) target = $region17
    $region16: #{tpu_custom_call.1} parent=1 // pred_region
      _
    $region17: #{tpu_custom_call.1} parent=1 // pred_fallthru
      _
    // Predicated region
    $region18: #{tpu_custom_call.1} parent=1 // pred_check
      _
    $region19: #{tpu_custom_call.1} parent=1 // pred_check_branch
      %21 = sbr.rel (0) target = $region21
    $region20: #{tpu_custom_call.1} parent=1 // pred_region
      _
    $region21: #{tpu_custom_call.1} parent=1 // pred_fallthru
      _
    // Predicated region
    $region22: #{tpu_custom_call.1} parent=1 // pred_check
      _
    $region23: #{tpu_custom_call.1} parent=1 // pred_check_branch
      %23 = sbr.rel (0) target = $region25
    $region24: #{tpu_custom_call.1} parent=1 // pred_region
      _
    $region25: #{tpu_custom_call.1} parent=1 // pred_fallthru
      _
    %v24 = vld [vmem:[%s0] sm:$0xff]
    %v25 = vld [vmem:[%s0 + $0x8] sm:$0xff]
    %v26 = vld [vmem:[%s0 + $0x10] sm:$0xff]
    %v27 = vld [vmem:[%s0 + $0x18] sm:$0xff]
    %v28 = vld [vmem:[%s1] sm:$0xff]
    %v29 = vld [vmem:[%s1 + $0x8] sm:$0xff]
    %v30 = vld [vmem:[%s1 + $0x10] sm:$0xff]
    %v31 = vld [vmem:[%s1 + $0x18] sm:$0xff]
    %v32 = vld [vmem:[%s2] sm:$0xff]
    %v33 = vld [vmem:[%s2 + $0x8] sm:$0xff]
    %v34 = vld [vmem:[%s2 + $0x10] sm:$0xff]
    %v35 = vld [vmem:[%s2 + $0x18] sm:$0xff]
    %v36 = vld [vmem:[%s2 + $0x20] sm:$0xff]
    %v37 = vld [vmem:[%s2 + $0x28] sm:$0xff]
    %v38 = vld [vmem:[%s2 + $0x30] sm:$0xff]
    %v39 = vld [vmem:[%s2 + $0x38] sm:$0xff]
    %v40 = vld [vmem:[%s2 + $0x40] sm:$0xff]
    %v41 = vld [vmem:[%s2 + $0x48] sm:$0xff]
    %v42 = vld [vmem:[%s2 + $0x50] sm:$0xff]
    %v43 = vld [vmem:[%s2 + $0x58] sm:$0xff]
    %vm44 = vcmask 261120
    %v46 = vsel %vm44, %v32, 0
    %v49 = vsel %vm44, %v33, 0
    %v52 = vsel %vm44, %v34, 0
    %v55 = vsel %vm44, %v35, 0
    %v58 = vsel %vm44, %v36, 0
    %v61 = vsel %vm44, %v37, 0
    %v64 = vsel %vm44, %v38, 0
    %v67 = vsel %vm44, %v39, 0
    %v70 = vsel %vm44, %v40, 0
    %v73 = vsel %vm44, %v41, 0
    %v76 = vsel %vm44, %v42, 0
    %v79 = vsel %vm44, %v43, 0
    %81 = vmatprep.subr.mxu0 0.0
    %82 = vmatpush1.msra.mxu0 %v24
    %83 = vmatprep.subr.mxu0 0.0
    %84 = vmatpush1.msra.mxu0 %v25
    %85 = vmatprep.subr.mxu0 0.0
    %86 = vmatpush1.msra.mxu0 %v26
    %87 = vmatprep.subr.mxu0 0.0
    %88 = vmatpush1.msra.mxu0 %v27
    %89 = vmatprep.subr.mxu0 0.0
    %90 = vmatpush1.msra.mxu0 0.0
    %91 = vmatprep.subr.mxu0 0.0
    %92 = vmatpush1.msra.mxu0 0.0
    %93 = vmatprep.subr.mxu0 0.0
    %94 = vmatpush1.msra.mxu0 0.0
    %95 = vmatprep.subr.mxu0 0.0
    %96 = vmatpush1.msra.mxu0 0.0
    %97 = vmatprep.subr.mxu0 0.0
    %98 = vmatpush1.msra.mxu0 0.0
    %99 = vmatprep.subr.mxu0 0.0
    %100 = vmatpush1.msra.mxu0 0.0
    %101 = vmatprep.subr.mxu0 0.0
    %102 = vmatpush1.msra.mxu0 0.0
    %103 = vmatprep.subr.mxu0 0.0
    %104 = vmatpush1.msra.mxu0 0.0
    %105 = vmatprep.subr.mxu0 0.0
    %106 = vmatpush1.msra.mxu0 0.0
    %107 = vmatprep.subr.mxu0 0.0
    %108 = vmatpush1.msra.mxu0 0.0
    %109 = vmatprep.subr.mxu0 0.0
    %110 = vmatpush1.msra.mxu0 0.0
    %111 = vmatprep.subr.mxu0 0.0
    %112 = vmatpush1.msra.mxu0 0.0
    %113 = vmatprep.subr.mxu0 0.0
    %114 = vmatpush1.msra.mxu0 0.0
    %115 = vmatprep.subr.mxu0 0.0
    %116 = vmatpush1.msra.mxu0 0.0
    %117 = vmatprep.subr.mxu0 0.0
    %118 = vmatpush1.msra.mxu0 0.0
    %119 = vmatprep.subr.mxu0 0.0
    %120 = vmatpush1.msra.mxu0 0.0
    %121 = vmatprep.subr.mxu0 0.0
    %122 = vmatpush1.msra.mxu0 0.0
    %123 = vmatprep.subr.mxu0 0.0
    %124 = vmatpush1.msra.mxu0 0.0
    %125 = vmatprep.subr.mxu0 0.0
    %126 = vmatpush1.msra.mxu0 0.0
    %127 = vmatprep.subr.mxu0 0.0
    %128 = vmatpush1.msra.mxu0 0.0
    %129 = vmatprep.subr.mxu0 0.0
    %130 = vmatpush1.msra.mxu0 0.0
    %131 = vmatprep.subr.mxu0 0.0
    %132 = vmatpush1.msra.mxu0 0.0
    %133 = vmatprep.subr.mxu0 0.0
    %134 = vmatpush1.msra.mxu0 0.0
    %135 = vmatprep.subr.mxu0 0.0
    %136 = vmatpush1.msra.mxu0 0.0
    %137 = vmatprep.subr.mxu0 0.0
    %138 = vmatpush1.msra.mxu0 0.0
    %139 = vmatprep.subr.mxu0 0.0
    %140 = vmatpush1.msra.mxu0 0.0
    %141 = vmatprep.subr.mxu0 0.0
    %142 = vmatpush1.msra.mxu0 0.0
    %143 = vmatprep.subr.mxu0 0.0
    %144 = vmatpush1.msra.mxu0 0.0
    %145 = vmatprep.mubr.f32.mxu0 0.0
    %146 = vmatmul.mubr.f32.gmra.mrb[0].mxu0 %v46
    %v147 = vpop.f32.mrb[0].mxu0
    %v148 = vadd.f32 0.0, %v147
    %v149 = vpop.f32.mrb[0].mxu0
    %150 = vmatprep.mubr.f32.mxu0 0.0
    %151 = vmatmul.mubr.f32.gmra.mrb[0].mxu0 %v49
    %v152 = vpop.f32.mrb[0].mxu0
    %v153 = vadd.f32 0.0, %v152
    %v154 = vpop.f32.mrb[0].mxu0
    %155 = vmatprep.mubr.f32.mxu0 0.0
    %156 = vmatmul.mubr.f32.gmra.mrb[0].mxu0 %v52
    %v157 = vpop.f32.mrb[0].mxu0
    %v158 = vadd.f32 0.0, %v157
    %v159 = vpop.f32.mrb[0].mxu0
    %160 = vmatprep.mubr.f32.mxu0 0.0
    %161 = vmatmul.mubr.f32.gmra.mrb[0].mxu0 %v55
    %v162 = vpop.f32.mrb[0].mxu0
    %v163 = vadd.f32 0.0, %v162
    %v164 = vpop.f32.mrb[0].mxu0
    %165 = vmatprep.mubr.f32.mxu0 0.0
    %166 = vmatmul.mubr.f32.gmra.mrb[0].mxu0 %v58
    %v167 = vpop.f32.mrb[0].mxu0
    %v168 = vadd.f32 0.0, %v167
    %v169 = vpop.f32.mrb[0].mxu0
    %170 = vmatprep.mubr.f32.mxu0 0.0
    %171 = vmatmul.mubr.f32.gmra.mrb[0].mxu0 %v61
    %v172 = vpop.f32.mrb[0].mxu0
    %v173 = vadd.f32 0.0, %v172
    %v174 = vpop.f32.mrb[0].mxu0
    %175 = vmatprep.mubr.f32.mxu0 0.0
    %176 = vmatmul.mubr.f32.gmra.mrb[0].mxu0 %v64
    %v177 = vpop.f32.mrb[0].mxu0
    %v178 = vadd.f32 0.0, %v177
    %v179 = vpop.f32.mrb[0].mxu0
    %180 = vmatprep.mubr.f32.mxu0 0.0
    %181 = vmatmul.mubr.f32.gmra.mrb[0].mxu0 %v67
    %v182 = vpop.f32.mrb[0].mxu0
    %v183 = vadd.f32 0.0, %v182
    %v184 = vpop.f32.mrb[0].mxu0
    %185 = vmatprep.mubr.f32.mxu0 0.0
    %186 = vmatmul.mubr.f32.gmra.mrb[0].mxu0 %v70
    %v187 = vpop.f32.mrb[0].mxu0
    %v188 = vadd.f32 0.0, %v187
    %v189 = vpop.f32.mrb[0].mxu0
    %190 = vmatprep.mubr.f32.mxu0 0.0
    %191 = vmatmul.mubr.f32.gmra.mrb[0].mxu0 %v73
    %v192 = vpop.f32.mrb[0].mxu0
    %v193 = vadd.f32 0.0, %v192
    %v194 = vpop.f32.mrb[0].mxu0
    %195 = vmatprep.mubr.f32.mxu0 0.0
    %196 = vmatmul.mubr.f32.gmra.mrb[0].mxu0 %v76
    %v197 = vpop.f32.mrb[0].mxu0
    %v198 = vadd.f32 0.0, %v197
    %v199 = vpop.f32.mrb[0].mxu0
    %200 = vmatprep.mubr.f32.mxu0 0.0
    %201 = vmatmul.mubr.f32.gmra.mrb[0].mxu0 %v79
    %v202 = vpop.f32.mrb[0].mxu0
    %v203 = vadd.f32 0.0, %v202
    %v204 = vpop.f32.mrb[0].mxu0
    %205 = vdwg.mxu0
    %v206 = vld [vmem:[%s3] sm:$0x1f]
    %v207 = vld [vmem:[%s5] sm:$0x1f]
    %209 = vset.pattern.permute.xlu0 0
    %210 = vperm.xlu0 %209, %v207
    %v211 = vpop.permute.xlu0 %210
    %v214 = vsel %vm44, %v206, 0
    %216 = vmatprep.subr.mxu0 0.0
    %217 = vmatpush1.msra.mxu0 %v28
    %218 = vmatprep.subr.mxu0 0.0
    %219 = vmatpush1.msra.mxu0 %v29
    %220 = vmatprep.subr.mxu0 0.0
    %221 = vmatpush1.msra.mxu0 %v30
    %222 = vmatprep.subr.mxu0 0.0
    %223 = vmatpush1.msra.mxu0 %v31
    %224 = vmatprep.subr.mxu0 0.0
    %225 = vmatpush1.msra.mxu0 0.0
    %226 = vmatprep.subr.mxu0 0.0
    %227 = vmatpush1.msra.mxu0 0.0
    %228 = vmatprep.subr.mxu0 0.0
    %229 = vmatpush1.msra.mxu0 0.0
    %230 = vmatprep.subr.mxu0 0.0
    %231 = vmatpush1.msra.mxu0 0.0
    %232 = vmatprep.subr.mxu0 0.0
    %233 = vmatpush1.msra.mxu0 0.0
    %234 = vmatprep.subr.mxu0 0.0
    %235 = vmatpush1.msra.mxu0 0.0
    %236 = vmatprep.subr.mxu0 0.0
    %237 = vmatpush1.msra.mxu0 0.0
    %238 = vmatprep.subr.mxu0 0.0
    %239 = vmatpush1.msra.mxu0 0.0
    %240 = vmatprep.subr.mxu0 0.0
    %241 = vmatpush1.msra.mxu0 0.0
    %242 = vmatprep.subr.mxu0 0.0
    %243 = vmatpush1.msra.mxu0 0.0
    %244 = vmatprep.subr.mxu0 0.0
    %245 = vmatpush1.msra.mxu0 0.0
    %246 = vmatprep.subr.mxu0 0.0
    %247 = vmatpush1.msra.mxu0 0.0
    %248 = vmatprep.subr.mxu0 0.0
    %249 = vmatpush1.msra.mxu0 0.0
    %250 = vmatprep.subr.mxu0 0.0
    %251 = vmatpush1.msra.mxu0 0.0
    %252 = vmatprep.subr.mxu0 0.0
    %253 = vmatpush1.msra.mxu0 0.0
    %254 = vmatprep.subr.mxu0 0.0
    %255 = vmatpush1.msra.mxu0 0.0
    %256 = vmatprep.subr.mxu0 0.0
    %257 = vmatpush1.msra.mxu0 0.0
    %258 = vmatprep.subr.mxu0 0.0
    %259 = vmatpush1.msra.mxu0 0.0
    %260 = vmatprep.subr.mxu0 0.0
    %261 = vmatpush1.msra.mxu0 0.0
    %262 = vmatprep.subr.mxu0 0.0
    %263 = vmatpush1.msra.mxu0 0.0
    %264 = vmatprep.subr.mxu0 0.0
    %265 = vmatpush1.msra.mxu0 0.0
    %266 = vmatprep.subr.mxu0 0.0
    %267 = vmatpush1.msra.mxu0 0.0
    %268 = vmatprep.subr.mxu0 0.0
    %269 = vmatpush1.msra.mxu0 0.0
    %270 = vmatprep.subr.mxu0 0.0
    %271 = vmatpush1.msra.mxu0 0.0
    %272 = vmatprep.subr.mxu0 0.0
    %273 = vmatpush1.msra.mxu0 0.0
    %274 = vmatprep.subr.mxu0 0.0
    %275 = vmatpush1.msra.mxu0 0.0
    %276 = vmatprep.subr.mxu0 0.0
    %277 = vmatpush1.msra.mxu0 0.0
    %278 = vmatprep.subr.mxu0 0.0
    %279 = vmatpush1.msra.mxu0 0.0
    %280 = vmatprep.mubr.f32.mxu0 0.0
    %281 = vmatmul.mubr.f32.gmra.mrb[0].mxu0 %v214
    %v282 = vpop.f32.mrb[0].mxu0
    %v283 = vadd.f32 %v211, %v282
    %v284 = vpop.f32.mrb[0].mxu0
    %285 = vdwg.mxu0
    %v286 = vld [vmem:[%s4] sm:$0x1f]
    %v287 = vmul.f32 %v148, %v28
    %v288 = vmul.f32 %v153, %v29
    %v289 = vmul.f32 %v158, %v30
    %v290 = vmul.f32 %v163, %v31
    %vm291 = vcmask 130048
    %v292 = vsel %vm291, %v287, 0.0
    %v293 = vsel %vm291, %v288, 0.0
    %v294 = vadd.f32 %v292, %v293
    %v295 = vsel %vm291, %v289, 0.0
    %v296 = vadd.f32 %v294, %v295
    %v297 = vsel %vm291, %v290, 0.0
    %v298 = vadd.f32 %v296, %v297
    %v299 = vrot.slane %v298, 4
    %v300 = vadd.f32 %v298, %v299
    %v301 = vrot.slane %v300, 2
    %v302 = vadd.f32 %v300, %v301
    %v303 = vrot.slane %v302, 1
    %v304 = vadd.f32 %v302, %v303
    %306 = vset.pattern.permute.xlu0 0
    %307 = vperm.xlu0 %306, %v286
    %v308 = vpop.permute.xlu0 %307
    %v310 = vmul.f32 %v308, %v304
    %v311 = vadd.f32 %v283, %v310
    %v312 = vmul.f32 %v168, %v28
    %v313 = vmul.f32 %v173, %v29
    %v314 = vmul.f32 %v178, %v30
    %v315 = vmul.f32 %v183, %v31
    %v316 = vsel %vm291, %v312, 0.0
    %v317 = vsel %vm291, %v313, 0.0
    %v318 = vadd.f32 %v316, %v317
    %v319 = vsel %vm291, %v314, 0.0
    %v320 = vadd.f32 %v318, %v319
    %v321 = vsel %vm291, %v315, 0.0
    %v322 = vadd.f32 %v320, %v321
    %v323 = vrot.slane %v322, 4
    %v324 = vadd.f32 %v322, %v323
    %v325 = vrot.slane %v324, 2
    %v326 = vadd.f32 %v324, %v325
    %v327 = vrot.slane %v326, 1
    %v328 = vadd.f32 %v326, %v327
    %329 = vset.pattern.permute.xlu0 1
    %330 = vperm.xlu0 %329, %v286
    %v331 = vpop.permute.xlu0 %330
    %v333 = vmul.f32 %v331, %v328
    %v334 = vadd.f32 %v311, %v333
    %v335 = vmul.f32 %v188, %v28
    %v336 = vmul.f32 %v193, %v29
    %v337 = vmul.f32 %v198, %v30
    %v338 = vmul.f32 %v203, %v31
    %v339 = vsel %vm291, %v335, 0.0
    %v340 = vsel %vm291, %v336, 0.0
    %v341 = vadd.f32 %v339, %v340
    %v342 = vsel %vm291, %v337, 0.0
    %v343 = vadd.f32 %v341, %v342
    %v344 = vsel %vm291, %v338, 0.0
    %v345 = vadd.f32 %v343, %v344
    %v346 = vrot.slane %v345, 4
    %v347 = vadd.f32 %v345, %v346
    %v348 = vrot.slane %v347, 2
    %v349 = vadd.f32 %v347, %v348
    %v350 = vrot.slane %v349, 1
    %v351 = vadd.f32 %v349, %v350
    %352 = vset.pattern.permute.xlu0 2
    %353 = vperm.xlu0 %352, %v286
    %v354 = vpop.permute.xlu0 %353
    %v356 = vmul.f32 %v354, %v351
    %v357 = vadd.f32 %v334, %v356
    %vm358 = vcmask 126976
    %359 = vst.msk [vmem:[#allocation2] sm:$0x1f] %vm358, %v357
    // Predicated region
    $region26: #{tpu_custom_call.1} parent=1 // pred_check
      _
    $region27: #{tpu_custom_call.1} parent=1 // pred_check_branch
      %361 = sbr.rel (0) target = $region29
    $region28: #{tpu_custom_call.1} parent=1 // pred_region
      %s363 = ssub.s32 128, 128
      %364 = vsyncadd [#allocation3], %s363
      %s366 = sshll.u32 [#allocation2], 4
      %s367 = int_to_ptr.vmem [resolvable:$true] %s366
      %369 = dma.vmem_to_hbm [thread:$0]  %s367, 128, %s6, [#allocation3]
    $region29: #{tpu_custom_call.1} parent=1 // pred_fallthru
      _
    // Predicated region
    $region30: #{tpu_custom_call.1} parent=1 // pred_check
      _
    $region31: #{tpu_custom_call.1} parent=1 // pred_check_branch
      %371 = sbr.rel (0) target = $region33
    $region32: #{tpu_custom_call.1} parent=1 // pred_region
      %372 = dma.done [#allocation3], 128
    $region33: #{tpu_custom_call.1} parent=1 // pred_fallthru
      _
    %373 = vsyncpa [#allocation3], 1

</llo_original>
